<compile_context>
chip_gen: v7x
topology: tpu7x:2x2x1
jax: 0.10.0
libtpu: 0.0.40
codegen_flags: <defaults>
</compile_context>

<pallas_src>
import functools

import jax
import jax.numpy as jnp
from jax import lax
from jax.experimental import pallas as pl
from jax.experimental.pallas import tpu as pltpu


def _dice_kernel(logits_ref, target_ref, loss_ref,
                 inter_acc, pred_acc, tgt_acc,
                 *, smooth, num_classes, tile_n, n_valid, masked):
    """Grid = (B, N_pad // tile_n).

    logits_ref: (1, C, TN)  native float dtype
    target_ref: (1, 1, TN)  integer class ids
    loss_ref:   (1, C, 1)   f32 output, resident across the n axis
    scratch:    inter/pred/tgt accumulators, each (C, TN) int32 — per-lane
                partial counts, reduced over lanes once at finalize.
    """
    n = pl.program_id(1)

    @pl.when(n == 0)
    def _init():
        inter_acc[...] = jnp.zeros_like(inter_acc)
        pred_acc[...] = jnp.zeros_like(pred_acc)
        tgt_acc[...] = jnp.zeros_like(tgt_acc)

    # Per-tile conversion in VMEM (free vs. the HBM stream).
    x = logits_ref[0].astype(jnp.float32)      # (C, TN)
    t = target_ref[0].astype(jnp.int32)        # (1, TN)

    classes = lax.broadcasted_iota(jnp.int32, x.shape, 0)   # (C, TN)

    # argmax over the channel (sublane) dim with first-occurrence
    # tie-breaking, matching torch.max(dim=1) index semantics.
    m = jnp.max(x, axis=0, keepdims=True)                   # (1, TN)
    cand = jnp.where(x == m, classes, jnp.int32(num_classes))
    pred = jnp.min(cand, axis=0, keepdims=True)             # (1, TN) i32

    pred_oh = classes == pred                                # (C, TN) bool
    tgt_oh = classes == t                                    # (C, TN) bool

    if masked:  # only emitted when the spatial axis was padded
        lane = lax.broadcasted_iota(jnp.int32, (1, tile_n), 1)
        valid = (n * tile_n + lane) < n_valid                # (1, TN) bool
        pred_oh = jnp.logical_and(pred_oh, valid)
        tgt_oh = jnp.logical_and(tgt_oh, valid)

    inter = jnp.logical_and(pred_oh, tgt_oh)

    # Pure VPU adds in the hot loop; no per-step lane reduction / relayout.
    inter_acc[...] += inter.astype(jnp.int32)
    pred_acc[...] += pred_oh.astype(jnp.int32)
    tgt_acc[...] += tgt_oh.astype(jnp.int32)

    @pl.when(n == pl.num_programs(1) - 1)
    def _finalize():
        i = jnp.sum(inter_acc[...], axis=-1, keepdims=True).astype(jnp.float32)
        p = jnp.sum(pred_acc[...], axis=-1, keepdims=True).astype(jnp.float32)
        g = jnp.sum(tgt_acc[...], axis=-1, keepdims=True).astype(jnp.float32)
        union = p + g - i                                    # (C, 1)
        loss_ref[0] = 1.0 - (i + smooth) / (union + smooth)


def _round_up(x, m):
    return (x + m - 1) // m * m


def _choose_tile_n(n, max_tile_n):
    """Pick a lane-dense tile (multiple of 128); pad + mask only if needed."""
    lane = 128
    max_tile_n = max(lane, (max_tile_n // lane) * lane)
    if n <= max_tile_n:
        return _round_up(n, lane)
    # Largest multiple of 128 <= max_tile_n that divides n exactly (no pad).
    t = max_tile_n
    while t >= lane:
        if n % t == 0:
            return t
        t -= lane
    return max_tile_n  # no exact divisor -> pad + mask


def dice_accuracy(logits, target, smooth=1.0, max_tile_n=2048):
    """logits: (B, C, *spatial) float; target: (B, *spatial) int class ids."""
    B, C = logits.shape[0], logits.shape[1]
    logits_r = logits.reshape(B, C, -1)            # keep native dtype on the wire
    N = logits_r.shape[2]
    target_r = target.reshape(B, 1, -1)
    if not jnp.issubdtype(target_r.dtype, jnp.integer):
        target_r = target_r.astype(jnp.int32)

    tile_n = _choose_tile_n(N, max_tile_n)
    n_pad = _round_up(N, tile_n)
    masked = n_pad != N
    if masked:
        pad = n_pad - N
        logits_r = jnp.pad(logits_r, ((0, 0), (0, 0), (0, pad)))
        target_r = jnp.pad(target_r, ((0, 0), (0, 0), (0, pad)))

    grid = (B, n_pad // tile_n)
    # TODO(synk): on v7x with B == 1, split the n axis into an extra
    # "parallel" grid dim (per-split partial counts combined in the wrapper)
    # so both TensorCores are used.
    loss_mat = pl.pallas_call(
        functools.partial(
            _dice_kernel,
            smooth=float(smooth),
            num_classes=C,
            tile_n=tile_n,
            n_valid=N,
            masked=masked,
        ),
        out_shape=jax.ShapeDtypeStruct((B, C, 1), jnp.float32),
        grid_spec=pltpu.PrefetchScalarGridSpec(
            num_scalar_prefetch=0,
            grid=grid,
            in_specs=[
                pl.BlockSpec((1, C, tile_n), lambda b, n: (b, 0, n)),
                pl.BlockSpec((1, 1, tile_n), lambda b, n: (b, 0, n)),
            ],
            out_specs=pl.BlockSpec((1, C, 1), lambda b, n: (b, 0, 0)),
            scratch_shapes=[pltpu.VMEM((C, tile_n), jnp.int32)] * 3,
        ),
        compiler_params=pltpu.CompilerParams(
            dimension_semantics=("parallel", "arbitrary")),
    )(logits_r, target_r)
    # mean over (B, C), same as torch.mean(loss)
    return jnp.mean(loss_mat)


def _dice_reference(logits, target, smooth=1.0):
    B, C = logits.shape[0], logits.shape[1]
    x = logits.reshape(B, C, -1).astype(jnp.float32)
    t = target.reshape(B, 1, -1).astype(jnp.int32)
    pred = jnp.argmax(x, axis=1)[:, None, :]
    cls = jnp.arange(C, dtype=jnp.int32)[None, :, None]
    pred_oh = (cls == pred).astype(jnp.float32)
    tgt_oh = (cls == t).astype(jnp.float32)
    inter = jnp.sum(pred_oh * tgt_oh, axis=2)
    union = jnp.sum(pred_oh + tgt_oh, axis=2) - inter
    return jnp.mean(1.0 - (inter + smooth) / (union + smooth))


if __name__ == "__main__":
    key = jax.random.PRNGKey(0)
    k1, k2 = jax.random.split(key)
    B, C, H, W = 2, 4, 16, 16
    logits = jax.random.normal(k1, (B, C, H, W), dtype=jnp.float32)
    target = jax.random.randint(k2, (B, H, W), 0, C, dtype=jnp.int32)

    out = dice_accuracy(logits, target, smooth=1.0)
    out = jax.block_until_ready(out)

    ref = _dice_reference(logits, target, smooth=1.0)
    assert jnp.allclose(out, ref, atol=1e-5, rtol=1e-5), (out, ref)

    # Also exercise the pad+mask path (N not a multiple of the chosen tile).
    H2, W2 = 10, 30  # N = 300 -> padded to 384 lanes, masked
    logits2 = jax.random.normal(k1, (B, C, H2, W2), dtype=jnp.float32)
    target2 = jax.random.randint(k2, (B, H2, W2), 0, C, dtype=jnp.int32)
    out2 = jax.block_until_ready(dice_accuracy(logits2, target2, smooth=1.0))
    ref2 = _dice_reference(logits2, target2, smooth=1.0)
    assert jnp.allclose(out2, ref2, atol=1e-5, rtol=1e-5), (out2, ref2)

    print("KERNEL_OK")
</pallas_src>

<mosaic_0001>
module attributes {stable_mosaic.version = 11 : i64} {
  func.func @_dice_kernel(%arg0: i32, %arg1: i32, %arg2: memref<1x4x256xf32, #tpu.memory_space<vmem>>, %arg3: memref<1x1x256xi32, #tpu.memory_space<vmem>>, %arg4: memref<1x4x1xf32, #tpu.memory_space<vmem>>, %arg5: memref<4x256xi32, #tpu.memory_space<vmem>>, %arg6: memref<4x256xi32, #tpu.memory_space<vmem>>, %arg7: memref<4x256xi32, #tpu.memory_space<vmem>>) attributes {dimension_semantics = [#tpu.dimension_semantics<parallel>, #tpu.dimension_semantics<arbitrary>], iteration_bounds = array<i64: 2, 1>, scalar_prefetch = 0 : i64, scratch_operands = 3 : i64, tpu.core_type = #tpu.core_type<tc>, window_params = [{transform_indices = @transform_0, window_bounds = array<i64: 1, 4, 256>}, {transform_indices = @transform_1, window_bounds = array<i64: 1, 1, 256>}, {transform_indices = @transform_2, window_bounds = array<i64: 1, 4, 1>}]} {
    %c0_i32 = arith.constant 0 : i32
    %0 = arith.cmpi eq, %arg1, %c0_i32 : i32
    %1 = arith.extui %0 : i1 to i32
    %c0_i32_0 = arith.constant 0 : i32
    %2 = arith.cmpi ne, %1, %c0_i32_0 : i32
    scf.if %2 {
      %c0_i32_21 = arith.constant 0 : i32
      %36 = vector.broadcast %c0_i32_21 : i32 to vector<4x256xi32>
      %c0_22 = arith.constant 0 : index
      %c0_23 = arith.constant 0 : index
      %37 = vector.load %arg5[%c0_22, %c0_23] : memref<4x256xi32, #tpu.memory_space<vmem>>, vector<4x256xi32>
      tpu.vector_store %arg5[%c0_22, %c0_23], %36 {strides = array<i32>} : memref<4x256xi32, #tpu.memory_space<vmem>>, vector<4x256xi32>,
      %c0_i32_24 = arith.constant 0 : i32
      %38 = vector.broadcast %c0_i32_24 : i32 to vector<4x256xi32>
      %c0_25 = arith.constant 0 : index
      %c0_26 = arith.constant 0 : index
      %39 = vector.load %arg6[%c0_25, %c0_26] : memref<4x256xi32, #tpu.memory_space<vmem>>, vector<4x256xi32>
      tpu.vector_store %arg6[%c0_25, %c0_26], %38 {strides = array<i32>} : memref<4x256xi32, #tpu.memory_space<vmem>>, vector<4x256xi32>,
      %c0_i32_27 = arith.constant 0 : i32
      %40 = vector.broadcast %c0_i32_27 : i32 to vector<4x256xi32>
      %c0_28 = arith.constant 0 : index
      %c0_29 = arith.constant 0 : index
      %41 = vector.load %arg7[%c0_28, %c0_29] : memref<4x256xi32, #tpu.memory_space<vmem>>, vector<4x256xi32>
      tpu.vector_store %arg7[%c0_28, %c0_29], %40 {strides = array<i32>} : memref<4x256xi32, #tpu.memory_space<vmem>>, vector<4x256xi32>,
    } else {
    }
    %c0 = arith.constant 0 : index
    %c0_1 = arith.constant 0 : index
    %c0_2 = arith.constant 0 : index
    %3 = vector.load %arg2[%c0, %c0_1, %c0_2] : memref<1x4x256xf32, #tpu.memory_space<vmem>>, vector<1x4x256xf32>
    %4 = vector.shape_cast %3 : vector<1x4x256xf32> to vector<4x256xf32>
    %c0_3 = arith.constant 0 : index
    %c0_4 = arith.constant 0 : index
    %c0_5 = arith.constant 0 : index
    %5 = vector.load %arg3[%c0_3, %c0_4, %c0_5] : memref<1x1x256xi32, #tpu.memory_space<vmem>>, vector<1x1x256xi32>
    %6 = vector.shape_cast %5 : vector<1x1x256xi32> to vector<1x256xi32>
    %7 = tpu.iota {dimensions = array<i32: 0>} : vector<4x256xi32>
    %cst = arith.constant dense<0xFF800000> : vector<256xf32>
    %8 = vector.multi_reduction <maximumf>, %4, %cst [0] : vector<4x256xf32> to vector<256xf32>
    %9 = vector.shape_cast %8 : vector<256xf32> to vector<1x256xf32>
    %10 = vector.broadcast %9 : vector<1x256xf32> to vector<4x256xf32>
    %11 = arith.cmpf oeq, %4, %10 : vector<4x256xf32>
    %c4_i32 = arith.constant 4 : i32
    %12 = vector.broadcast %c4_i32 : i32 to vector<4x256xi32>
    %13 = arith.select %11, %7, %12 : vector<4x256xi1>, vector<4x256xi32>
    %cst_6 = arith.constant dense<2147483647> : vector<256xi32>
    %14 = vector.multi_reduction <minsi>, %13, %cst_6 [0] : vector<4x256xi32> to vector<256xi32>
    %15 = vector.shape_cast %14 : vector<256xi32> to vector<1x256xi32>
    %16 = vector.broadcast %15 : vector<1x256xi32> to vector<4x256xi32>
    %17 = arith.cmpi eq, %7, %16 : vector<4x256xi32>
    %18 = vector.broadcast %6 : vector<1x256xi32> to vector<4x256xi32>
    %19 = arith.cmpi eq, %7, %18 : vector<4x256xi32>
    %20 = arith.andi %17, %19 : vector<4x256xi1>
    %c0_7 = arith.constant 0 : index
    %c0_8 = arith.constant 0 : index
    %21 = vector.load %arg5[%c0_7, %c0_8] : memref<4x256xi32, #tpu.memory_space<vmem>>, vector<4x256xi32>
    %22 = arith.extui %20 : vector<4x256xi1> to vector<4x256xi32>
    %23 = arith.addi %21, %22 : vector<4x256xi32>
    %c0_9 = arith.constant 0 : index
    %c0_10 = arith.constant 0 : index
    %24 = vector.load %arg5[%c0_9, %c0_10] : memref<4x256xi32, #tpu.memory_space<vmem>>, vector<4x256xi32>
    tpu.vector_store %arg5[%c0_9, %c0_10], %23 {strides = array<i32>} : memref<4x256xi32, #tpu.memory_space<vmem>>, vector<4x256xi32>,
    %c0_11 = arith.constant 0 : index
    %c0_12 = arith.constant 0 : index
    %25 = vector.load %arg6[%c0_11, %c0_12] : memref<4x256xi32, #tpu.memory_space<vmem>>, vector<4x256xi32>
    %26 = arith.extui %17 : vector<4x256xi1> to vector<4x256xi32>
    %27 = arith.addi %25, %26 : vector<4x256xi32>
    %c0_13 = arith.constant 0 : index
    %c0_14 = arith.constant 0 : index
    %28 = vector.load %arg6[%c0_13, %c0_14] : memref<4x256xi32, #tpu.memory_space<vmem>>, vector<4x256xi32>
    tpu.vector_store %arg6[%c0_13, %c0_14], %27 {strides = array<i32>} : memref<4x256xi32, #tpu.memory_space<vmem>>, vector<4x256xi32>,
    %c0_15 = arith.constant 0 : index
    %c0_16 = arith.constant 0 : index
    %29 = vector.load %arg7[%c0_15, %c0_16] : memref<4x256xi32, #tpu.memory_space<vmem>>, vector<4x256xi32>
    %30 = arith.extui %19 : vector<4x256xi1> to vector<4x256xi32>
    %31 = arith.addi %29, %30 : vector<4x256xi32>
    %c0_17 = arith.constant 0 : index
    %c0_18 = arith.constant 0 : index
    %32 = vector.load %arg7[%c0_17, %c0_18] : memref<4x256xi32, #tpu.memory_space<vmem>>, vector<4x256xi32>
    tpu.vector_store %arg7[%c0_17, %c0_18], %31 {strides = array<i32>} : memref<4x256xi32, #tpu.memory_space<vmem>>, vector<4x256xi32>,
    %c0_i32_19 = arith.constant 0 : i32
    %33 = arith.cmpi eq, %arg1, %c0_i32_19 : i32
    %34 = arith.extui %33 : i1 to i32
    %c0_i32_20 = arith.constant 0 : i32
    %35 = arith.cmpi ne, %34, %c0_i32_20 : i32
    scf.if %35 {
      %c0_21 = arith.constant 0 : index
      %c0_22 = arith.constant 0 : index
      %36 = vector.load %arg5[%c0_21, %c0_22] : memref<4x256xi32, #tpu.memory_space<vmem>>, vector<4x256xi32>
      %cst_23 = arith.constant dense<0> : vector<4xi32>
      %37 = vector.multi_reduction <add>, %36, %cst_23 [1] : vector<4x256xi32> to vector<4xi32>
      %38 = vector.shape_cast %37 : vector<4xi32> to vector<4x1xi32>
      %39 = arith.sitofp %38 : vector<4x1xi32> to vector<4x1xf32>
      %c0_24 = arith.constant 0 : index
      %c0_25 = arith.constant 0 : index
      %40 = vector.load %arg6[%c0_24, %c0_25] : memref<4x256xi32, #tpu.memory_space<vmem>>, vector<4x256xi32>
      %cst_26 = arith.constant dense<0> : vector<4xi32>
      %41 = vector.multi_reduction <add>, %40, %cst_26 [1] : vector<4x256xi32> to vector<4xi32>
      %42 = vector.shape_cast %41 : vector<4xi32> to vector<4x1xi32>
      %43 = arith.sitofp %42 : vector<4x1xi32> to vector<4x1xf32>
      %c0_27 = arith.constant 0 : index
      %c0_28 = arith.constant 0 : index
      %44 = vector.load %arg7[%c0_27, %c0_28] : memref<4x256xi32, #tpu.memory_space<vmem>>, vector<4x256xi32>
      %cst_29 = arith.constant dense<0> : vector<4xi32>
      %45 = vector.multi_reduction <add>, %44, %cst_29 [1] : vector<4x256xi32> to vector<4xi32>
      %46 = vector.shape_cast %45 : vector<4xi32> to vector<4x1xi32>
      %47 = arith.sitofp %46 : vector<4x1xi32> to vector<4x1xf32>
      %48 = arith.addf %43, %47 : vector<4x1xf32>
      %49 = arith.subf %48, %39 : vector<4x1xf32>
      %cst_30 = arith.constant 1.000000e+00 : f32
      %50 = vector.broadcast %cst_30 : f32 to vector<4x1xf32>
      %51 = arith.addf %39, %50 : vector<4x1xf32>
      %cst_31 = arith.constant 1.000000e+00 : f32
      %52 = vector.broadcast %cst_31 : f32 to vector<4x1xf32>
      %53 = arith.addf %49, %52 : vector<4x1xf32>
      %54 = arith.divf %51, %53 : vector<4x1xf32>
      %cst_32 = arith.constant 1.000000e+00 : f32
      %55 = vector.broadcast %cst_32 : f32 to vector<4x1xf32>
      %56 = arith.subf %55, %54 : vector<4x1xf32>
      %c0_33 = arith.constant 0 : index
      %c0_34 = arith.constant 0 : index
      %c0_35 = arith.constant 0 : index
      %57 = vector.load %arg4[%c0_33, %c0_34, %c0_35] : memref<1x4x1xf32, #tpu.memory_space<vmem>>, vector<1x4x1xf32>
      %58 = vector.shape_cast %57 : vector<1x4x1xf32> to vector<4x1xf32>
      %59 = vector.shape_cast %56 : vector<4x1xf32> to vector<1x4x1xf32>
      tpu.vector_store %arg4[%c0_33, %c0_34, %c0_35], %59 {strides = array<i32>} : memref<1x4x1xf32, #tpu.memory_space<vmem>>, vector<1x4x1xf32>,
    } else {
    }
    return
  }
  func.func @transform_0(%arg0: i32, %arg1: i32) -> (i32, i32, i32) {
    %c0_i32 = arith.constant 0 : i32
    %c0_i32_0 = arith.constant 0 : i32
    return %arg0, %c0_i32, %arg1 : i32, i32, i32
  }
  func.func @transform_1(%arg0: i32, %arg1: i32) -> (i32, i32, i32) {
    %c0_i32 = arith.constant 0 : i32
    %c0_i32_0 = arith.constant 0 : i32
    return %arg0, %c0_i32, %arg1 : i32, i32, i32
  }
  func.func @transform_2(%arg0: i32, %arg1: i32) -> (i32, i32, i32) {
    %c0_i32 = arith.constant 0 : i32
    %c0_i32_0 = arith.constant 0 : i32
    %c0_i32_1 = arith.constant 0 : i32
    return %arg0, %c0_i32, %c0_i32_0 : i32, i32, i32
  }
}

</mosaic_0001>

<llo_original>
// kernel: tpu_custom_call.1
$region0: #{tpu_custom_call.1}
  #allocation0 [shape = 'u32[]', space=smem, size = 0x4, offset = 0x4, fixed_abs, tag = 'smem constant byte address 0x4 - core index']
  #allocation1 [shape = 'u32[144,128]{1,0:T(1,128)}', space=vmem, size = 0x12000, scoped, tag = 'internal scratch']
  #allocation2 [shape = 's32[4,256]{1,0:T(4,128)}', space=vmem, size = 0x1000, scoped, tag = 'scratch operand']
  #allocation3 [shape = 's32[4,256]{1,0:T(4,128)}', space=vmem, size = 0x1000, scoped, tag = 'scratch operand']
  #allocation4 [shape = 's32[4,256]{1,0:T(4,128)}', space=vmem, size = 0x1000, scoped, tag = 'scratch operand']
  %s0 = inlined_call_operand.hbm [shape: f32[2,4,256], index: 0, kind: input, shape index: {}]
  %s1 = inlined_call_operand.hbm [shape: s32[2,1,256], index: 1, kind: input, shape index: {}]
  %s2 = inlined_call_operand.vmem [shape: f32[2,4,1], index: 2, kind: output, shape index: {}]
  %s3 = sld [smem:[#allocation0]]
  $region57: #{tpu_custom_call.1} parent=0
    _
  %s5 = ssub.s32 1, %s3
  %s6 = scalar_select 0, %s5, %s3
  $region1: #{tpu_custom_call.1} parent=0
    #allocation5 [shape = 'u8[8192]{0}', space=vmem, size = 0x2000, scoped, tag = 'input window, operand 0']
    #allocation6 [shape = 's32[2]{0}', space=sflag, size = 0x8, scoped, tag = 'scoped memory for tpu_custom_call.1']
    #allocation7 [shape = 'u8[2048]{0}', space=vmem, size = 0x800, scoped, tag = 'input window, operand 1']
    #allocation8 [shape = 's32[2]{0}', space=sflag, size = 0x8, scoped, tag = 'scoped memory for tpu_custom_call.1']
    %7 = vsyncpa [#allocation6], 0
    %s8 = scalar_lea.sflag [#allocation6], 1
    %9 = vsyncpa %s8, 0
    %10 = vsyncpa [#allocation8], 0
    %s11 = scalar_lea.sflag [#allocation8], 1
    %12 = vsyncpa %s11, 0
    loop: start=0, step=1, limit=4
    $region2: #{tpu_custom_call.1} parent=1 // loop_pre_header
      _
    $region3: #{tpu_custom_call.1} parent=1 // loop_header
      %s14 = sphi 0, %s18
      %p15 = scmp.ge.s32.totalorder %s14, 4
      %s21 = sphi 0, %s33
      %s22 = sphi 0, %s29
      %s23 = sphi 0, %s21
      %s24 = sphi 0, %s22
      %s25 = sphi 0, %s23
      %s26 = sphi 0, %s24
      %s38 = sphi 0, %s40
      %s41 = sphi 0, %s38
      %s42 = sphi 0, %s41
      %s58 = sphi 0, %s42
      %s66 = sphi 0, %s68
      %s69 = sphi 0, %s66
      %s70 = sphi 0, %s69
      %s86 = sphi 0, %s70
      %s92 = sphi 0, %s94
      %s95 = sphi 0, %s92
      %s96 = sphi 0, %s95
      %s112 = sphi 0, %s96
    $region4: #{tpu_custom_call.1} parent=1 // loop_header_branch
      %17 = sbr.rel (%p15) target = $region8
    $region5: #{tpu_custom_call.1} parent=1 // loop_body
      %s19 = ssub.s32 %s14, 1
      %s20 = ssub.s32 %s14, 2
      %s27 = sadd.s32 1, %s22
      %p28 = scmp.ge.s32.totalorder %s27, 1
      %s29 = scalar_select %p28, 0, %s27
      %s30 = sadd.s32 1, %s21
      %s31 = scalar_select %p28, %s30, %s21
      %p32 = scmp.ge.s32.totalorder %s31, 2
      %s33 = scalar_select %p32, 0, %s31
      %s34 = ssub.s32 %s21, %s33
      %s35 = ssub.s32 %s22, %s29
      %s36 = sor.u32 %s34, %s35
      %p37 = scmp.eq.s32.totalorder %s36, 0
      %s39 = sadd.s32 %s38, 1
      %s40 = scalar_select %p37, %s38, %s39
      %p43 = pneg %p37
      %p44 = scmp.eq.s32.totalorder %s14, 1
      %p45 = por %p43, %p44
      %p46 = scmp.ne.s32.totalorder %s38, %s41
      %p47 = scmp.eq.s32.totalorder %s14, 0
      %p48 = por %p46, %p47
      %p49 = scmp.ne.s32.totalorder %s38, %s41
      %p50 = scmp.eq.s32.totalorder %s19, 1
      %p51 = por %p49, %p50
      %p52 = scmp.ne.s32.totalorder %s41, %s42
      %p53 = scmp.eq.s32.totalorder %s19, 0
      %p54 = por %p52, %p53
      %p55 = scmp.ne.s32.totalorder %s41, %s42
      %p56 = scmp.eq.s32.totalorder %s20, 1
      %p57 = por %p55, %p56
      %p59 = scmp.ne.s32.totalorder %s42, %s58
      %p60 = scmp.eq.s32.totalorder %s20, 0
      %p61 = por %p59, %p60
      %s62 = ssub.s32 %s21, %s33
      %s63 = ssub.s32 %s22, %s29
      %s64 = sor.u32 %s62, %s63
      %p65 = scmp.eq.s32.totalorder %s64, 0
      %s67 = sadd.s32 %s66, 1
      %s68 = scalar_select %p65, %s66, %s67
      %p71 = pneg %p65
      %p72 = scmp.eq.s32.totalorder %s14, 1
      %p73 = por %p71, %p72
      %p74 = scmp.ne.s32.totalorder %s66, %s69
      %p75 = scmp.eq.s32.totalorder %s14, 0
      %p76 = por %p74, %p75
      %p77 = scmp.ne.s32.totalorder %s66, %s69
      %p78 = scmp.eq.s32.totalorder %s19, 1
      %p79 = por %p77, %p78
      %p80 = scmp.ne.s32.totalorder %s69, %s70
      %p81 = scmp.eq.s32.totalorder %s19, 0
      %p82 = por %p80, %p81
      %p83 = scmp.ne.s32.totalorder %s69, %s70
      %p84 = scmp.eq.s32.totalorder %s20, 1
      %p85 = por %p83, %p84
      %p87 = scmp.ne.s32.totalorder %s70, %s86
      %p88 = scmp.eq.s32.totalorder %s20, 0
      %p89 = por %p87, %p88
      %s90 = ssub.s32 %s21, %s33
      %p91 = scmp.eq.s32.totalorder %s90, 0
      %s93 = sadd.s32 %s92, 1
      %s94 = scalar_select %p91, %s92, %s93
      %p97 = pneg %p91
      %p98 = scmp.eq.s32.totalorder %s14, 1
      %p99 = por %p97, %p98
      %p100 = scmp.ne.s32.totalorder %s92, %s95
      %p101 = scmp.eq.s32.totalorder %s14, 0
      %p102 = por %p100, %p101
      %p103 = scmp.ne.s32.totalorder %s92, %s95
      %p104 = scmp.eq.s32.totalorder %s19, 1
      %p105 = por %p103, %p104
      %p106 = scmp.ne.s32.totalorder %s95, %s96
      %p107 = scmp.eq.s32.totalorder %s19, 0
      %p108 = por %p106, %p107
      %p109 = scmp.ne.s32.totalorder %s95, %s96
      %p110 = scmp.eq.s32.totalorder %s20, 1
      %p111 = por %p109, %p110
      %p113 = scmp.ne.s32.totalorder %s96, %s112
      %p114 = scmp.eq.s32.totalorder %s20, 0
      %p115 = por %p113, %p114
      %p116 = scmp.le.s32.totalorder 1, %s14
      %p117 = scmp.lt.s32.totalorder %s14, 3
      %p118 = pnand %p116, %p117
      %p119 = pneg %p118
      // Predicated region
      $region9: #{tpu_custom_call.1} parent=5 // pred_check
        _
      $region10: #{tpu_custom_call.1} parent=5 // pred_check_branch
        %121 = sbr.rel (%p118) target = $region12
      $region11: #{tpu_custom_call.1} parent=5 // pred_region
        %s122 = ssub.s32 %s14, 1
      $region12: #{tpu_custom_call.1} parent=5 // pred_fallthru
        _
      %p123 = scmp.lt.s32.totalorder %s14, 2
      // Predicated region
      $region13: #{tpu_custom_call.1} parent=5 // pred_check
        %p124 = pneg %p123
      $region14: #{tpu_custom_call.1} parent=5 // pred_check_branch
        %126 = sbr.rel (%p124) target = $region16
      $region15: #{tpu_custom_call.1} parent=5 // pred_region
        // Predicated region
        $region17: #{tpu_custom_call.1} parent=15 // pred_check
          %p127 = pneg %p48
        $region18: #{tpu_custom_call.1} parent=15 // pred_check_branch
          %129 = sbr.rel (%p127) target = $region20
        $region19: #{tpu_custom_call.1} parent=15 // pred_region
          %s130 = sand.u32 %s38, 1
          %s131 = scalar_lea.sflag [#allocation6], %s130
          %s132 = sand.u32 %s38, 1
          %s133 = smul.addr %s132, 8
          %s134 = scalar_lea.vmem [#allocation5], %s133
          %s135 = smul.u32 2, %s22
          %s137 = ssub.s32 128, 128
          %138 = vsyncadd %s131, %s137
          %s139 = smul.addr %s21, 2
          %s140 = sadd.s32 %s135, %s139
          %s141 = smul.addr %s140, 64
          %s142 = scalar_lea.hbm %s0, %s141
          %s144 = sshll.u32 %s134, 4
          %s145 = int_to_ptr.vmem [resolvable:$true] %s144
          %147 = dma.hbm_to_vmem [thread:$0]  %s142, 128, %s145, %s131
        $region20: #{tpu_custom_call.1} parent=15 // pred_fallthru
          _
        // Predicated region
        $region21: #{tpu_custom_call.1} parent=15 // pred_check
          %p148 = pneg %p76
        $region22: #{tpu_custom_call.1} parent=15 // pred_check_branch
          %150 = sbr.rel (%p148) target = $region24
        $region23: #{tpu_custom_call.1} parent=15 // pred_region
          %s151 = sand.u32 %s66, 1
          %s152 = scalar_lea.sflag [#allocation8], %s151
          %s153 = sand.u32 %s66, 1
          %s154 = smul.addr %s153, 2
          %s155 = scalar_lea.vmem [#allocation7], %s154
          %s156 = smul.u32 2, %s22
          %s158 = ssub.s32 32, 32
          %159 = vsyncadd %s152, %s158
          %s160 = smul.addr %s21, 2
          %s161 = sadd.s32 %s156, %s160
          %s162 = smul.addr %s161, 16
          %s163 = scalar_lea.hbm %s1, %s162
          %s165 = sshll.u32 %s155, 4
          %s166 = int_to_ptr.vmem [resolvable:$true] %s165
          %168 = dma.hbm_to_vmem [thread:$0]  %s163, 32, %s166, %s152
        $region24: #{tpu_custom_call.1} parent=15 // pred_fallthru
          _
      $region16: #{tpu_custom_call.1} parent=5 // pred_fallthru
        _
      %p169 = scmp.le.s32.totalorder 1, %s14
      %p170 = scmp.lt.s32.totalorder %s14, 3
      %p171 = pnand %p169, %p170
      %p172 = pneg %p171
      // Predicated region
      $region25: #{tpu_custom_call.1} parent=5 // pred_check
        _
      $region26: #{tpu_custom_call.1} parent=5 // pred_check_branch
        %174 = sbr.rel (%p171) target = $region28
      $region27: #{tpu_custom_call.1} parent=5 // pred_region
        %s175 = ssub.s32 %s14, 1
        %s176 = sand.u32 %s41, 1
        %s177 = scalar_lea.sflag [#allocation6], %s176
        %s178 = sand.u32 %s41, 1
        %s179 = smul.addr %s178, 8
        %s180 = scalar_lea.vmem [#allocation5], %s179
        // Predicated region
        $region29: #{tpu_custom_call.1} parent=27 // pred_check
          %p181 = pneg %p54
        $region30: #{tpu_custom_call.1} parent=27 // pred_check_branch
          %183 = sbr.rel (%p181) target = $region32
        $region31: #{tpu_custom_call.1} parent=27 // pred_region
          %184 = dma.done %s177, 128
        $region32: #{tpu_custom_call.1} parent=27 // pred_fallthru
          _
        %s185 = sand.u32 %s69, 1
        %s186 = scalar_lea.sflag [#allocation8], %s185
        %s187 = sand.u32 %s69, 1
        %s188 = smul.addr %s187, 2
        %s189 = scalar_lea.vmem [#allocation7], %s188
        // Predicated region
        $region33: #{tpu_custom_call.1} parent=27 // pred_check
          %p190 = pneg %p82
        $region34: #{tpu_custom_call.1} parent=27 // pred_check_branch
          %192 = sbr.rel (%p190) target = $region36
        $region35: #{tpu_custom_call.1} parent=27 // pred_region
          %193 = dma.done %s186, 32
        $region36: #{tpu_custom_call.1} parent=27 // pred_fallthru
          _
        %s194 = sand.u32 %s41, 1
        %s195 = scalar_lea.sflag [#allocation6], %s194
        %s196 = sand.u32 %s41, 1
        %s197 = smul.addr %s196, 8
        %s198 = scalar_lea.vmem [#allocation5], %s197
        %p199 = pneg %p54
        %p200 = pneg %p51
        %s201 = sand.u32 %s69, 1
        %s202 = scalar_lea.sflag [#allocation8], %s201
        %s203 = sand.u32 %s69, 1
        %s204 = smul.addr %s203, 2
        %s205 = scalar_lea.vmem [#allocation7], %s204
        %p206 = pneg %p82
        %p207 = pneg %p79
        %p208 = pneg %p108
        %p209 = pneg %p105
        %p210 = scmp.lt.s32.totalorder %s23, 1
        %s211 = scalar_select %p210, %s23, 1
        %s212 = smul.addr %s211, 4
        %s213 = scalar_lea.vmem %s2, %s212
        %s214 = smul.u32 2, %s24
        %s215 = smul.u32 2, %s24
        %p216 = scmp.lt.s32.totalorder %s23, 1
        %s217 = scalar_select %p216, %s23, 1
        %s218 = smul.addr %s217, 4
        %s219 = scalar_lea.vmem %s2, %s218
        %p220 = scmp.eq.s32.totalorder %s24, 0
        // Predicated region
        $region37: #{tpu_custom_call.1} parent=27 // pred_check
          %p221 = pneg %p220
        $region38: #{tpu_custom_call.1} parent=27 // pred_check_branch
          %223 = sbr.rel (%p221) target = $region40
        $region39: #{tpu_custom_call.1} parent=27 // pred_region
          %224 = vst [vmem:[#allocation2] sm:$0xff] 0
          %225 = vst [vmem:[#allocation3] sm:$0xff] 0
          %226 = vst [vmem:[#allocation4] sm:$0xff] 0
        $region40: #{tpu_custom_call.1} parent=27 // pred_fallthru
          _
        %v227 = vld [vmem:[%s180] sm:$0xff]
        %v228 = vld [vmem:[%s189] sm:$0x3]
        %v229 = vlaneseq
        %v230 = vshrl.u32 %v229, 7
        %v232 = vcombine.high %v227, %v227
        %vm234 = vcmask 1043456
        %v235 = vsel %vm234, %v227, -inf
        %v236 = vrot.slane %v235, 4
        %v237 = vmax.f32 %v235, %v236
        %v238 = vrot.slane %v237, 2
        %v239 = vmax.f32 %v237, %v238
        %v240 = vrot.slane %v239, 1
        %v241 = vmax.f32 %v239, %v240
        %v242 = vsel %vm234, %v232, -inf
        %v243 = vrot.slane %v242, 4
        %v244 = vmax.f32 %v242, %v243
        %v245 = vrot.slane %v244, 2
        %v246 = vmax.f32 %v244, %v245
        %v247 = vrot.slane %v246, 1
        %v248 = vmax.f32 %v246, %v247
        %v251 = vcombine.low %v241, %v248
        %vm253 = vcmp.eq.f32.partialorder %v227, %v251
        %v255 = vunpack.c.l.s4 839922192
        %v256 = vunpack.c.0.s8 %v255
        %v257 = vlaneseq
        %v258 = vshrl.u32 %v257, 7
        %v259 = vsub.s32 %v256, %v258
        %v260 = vrot.slane %v230, %v259
        %v261 = vsel %vm253, %v260, 4
        %v262 = vcombine.high %v261, %v261
        %v263 = vsel %vm234, %v261, 2147483647
        %v264 = vrot.slane %v263, 4
        %vm265 = vcmp.lt.s32.totalorder %v263, %v264
        %v266 = vsel %vm265, %v263, %v264
        %v267 = vrot.slane %v266, 2
        %vm268 = vcmp.lt.s32.totalorder %v266, %v267
        %v269 = vsel %vm268, %v266, %v267
        %v270 = vrot.slane %v269, 1
        %vm271 = vcmp.lt.s32.totalorder %v269, %v270
        %v272 = vsel %vm271, %v269, %v270
        %v273 = vsel %vm234, %v262, 2147483647
        %v274 = vrot.slane %v273, 4
        %vm275 = vcmp.lt.s32.totalorder %v273, %v274
        %v276 = vsel %vm275, %v273, %v274
        %v277 = vrot.slane %v276, 2
        %vm278 = vcmp.lt.s32.totalorder %v276, %v277
        %v279 = vsel %vm278, %v276, %v277
        %v280 = vrot.slane %v279, 1
        %vm281 = vcmp.lt.s32.totalorder %v279, %v280
        %v282 = vsel %vm281, %v279, %v280
        %vm283 = vcmp.eq.s32.totalorder %v230, %v272
        %vm284 = vcmp.eq.s32.totalorder %v230, %v282
        %v285 = vlaneseq
        %v286 = vshrl.u32 %v285, 7
        %v287 = vsub.s32 0, %v286
        %v288 = vrot.slane %v228, %v287
        %v289 = vlaneseq
        %v290 = vshrl.u32 %v289, 7
        %v291 = vsub.s32 1, %v290
        %v292 = vrot.slane %v228, %v291
        %vm293 = vcmp.eq.s32.totalorder %v230, %v288
        %vm294 = vcmp.eq.s32.totalorder %v230, %v292
        %vm295 = vmand %vm283, %vm293
        %vm296 = vmand %vm284, %vm294
        %v297 = vld [vmem:[#allocation2] sm:$0xff]
        %v298 = vsel %vm295, 1, 0
        %v299 = vsel %vm296, 1, 0
        %v300 = vcombine.low %v298, %v299
        %v301 = vadd.s32 %v297, %v300
        %302 = vst [vmem:[#allocation2] sm:$0xff] %v301
        %v303 = vld [vmem:[#allocation3] sm:$0xff]
        %v304 = vsel %vm283, 1, 0
        %v305 = vsel %vm284, 1, 0
        %v306 = vcombine.low %v304, %v305
        %v307 = vadd.s32 %v303, %v306
        %308 = vst [vmem:[#allocation3] sm:$0xff] %v307
        %v309 = vld [vmem:[#allocation4] sm:$0xff]
        %v310 = vsel %vm293, 1, 0
        %v311 = vsel %vm294, 1, 0
        %v312 = vcombine.low %v310, %v311
        %v313 = vadd.s32 %v309, %v312
        %314 = vst [vmem:[#allocation4] sm:$0xff] %v313
        // Predicated region
        $region41: #{tpu_custom_call.1} parent=27 // pred_check
          %p315 = pneg %p220
        $region42: #{tpu_custom_call.1} parent=27 // pred_check_branch
          %317 = sbr.rel (%p315) target = $region44
        $region43: #{tpu_custom_call.1} parent=27 // pred_region
          %v318 = vld [vmem:[#allocation2] sm:$0xff]
          %v319 = vcombine.high %v318, %v318
          %v320 = vsel %vm234, %v318, 0
          %v321 = vsel %vm234, %v319, 0
          %v322 = vadd.s32 %v320, %v321
          %v323 = vand.u32 %v322, 65535
          %v324 = vshrl.u32 %v322, 16
          %v325 = vcvt.s32.f32 %v323
          %v326 = vcvt.s32.f32 %v324
          %327 = vadd.xlane.f32.xlu0 %v325
          %v328 = vpop.xlane.xlu0 %327
          %329 = vadd.xlane.f32.xlu0 %v326
          %v330 = vpop.xlane.xlu0 %329
          %v331 = vcvt.f32.s32 %v328
          %v332 = vcvt.f32.s32 %v330
          %v333 = vshll.u32 %v332, 16
          %v334 = vadd.s32 %v333, %v331
          %v335 = vcvt.s32.f32 %v334
          %v336 = vld [vmem:[#allocation3] sm:$0xff]
          %v337 = vcombine.high %v336, %v336
          %v338 = vsel %vm234, %v336, 0
          %v339 = vsel %vm234, %v337, 0
          %v340 = vadd.s32 %v338, %v339
          %v341 = vand.u32 %v340, 65535
          %v342 = vshrl.u32 %v340, 16
          %v343 = vcvt.s32.f32 %v341
          %v344 = vcvt.s32.f32 %v342
          %345 = vadd.xlane.f32.xlu0 %v343
          %v346 = vpop.xlane.xlu0 %345
          %347 = vadd.xlane.f32.xlu0 %v344
          %v348 = vpop.xlane.xlu0 %347
          %v349 = vcvt.f32.s32 %v346
          %v350 = vcvt.f32.s32 %v348
          %v351 = vshll.u32 %v350, 16
          %v352 = vadd.s32 %v351, %v349
          %v353 = vcvt.s32.f32 %v352
          %v354 = vld [vmem:[#allocation4] sm:$0xff]
          %v355 = vcombine.high %v354, %v354
          %v356 = vsel %vm234, %v354, 0
          %v357 = vsel %vm234, %v355, 0
          %v358 = vadd.s32 %v356, %v357
          %v359 = vand.u32 %v358, 65535
          %v360 = vshrl.u32 %v358, 16
          %v361 = vcvt.s32.f32 %v359
          %v362 = vcvt.s32.f32 %v360
          %363 = vadd.xlane.f32.xlu0 %v361
          %v364 = vpop.xlane.xlu0 %363
          %365 = vadd.xlane.f32.xlu0 %v362
          %v366 = vpop.xlane.xlu0 %365
          %v367 = vcvt.f32.s32 %v364
          %v368 = vcvt.f32.s32 %v366
          %v369 = vshll.u32 %v368, 16
          %v370 = vadd.s32 %v369, %v367
          %v371 = vcvt.s32.f32 %v370
          %v372 = vadd.f32 %v353, %v371
          %v373 = vsub.f32 %v372, %v335
          %v374 = vadd.f32 %v335, 1.0
          %v375 = vadd.f32 %v373, 1.0
          %v376 = vrcp.pop %v375
          %v377 = vmul.f32 %v374, %v376
          %v378 = vsub.f32 1.0, %v377
          %vm379 = vcmask 3072
          %380 = vst.msk [vmem:[%s219] sm:$0xf] %vm379, %v378
        $region44: #{tpu_custom_call.1} parent=27 // pred_fallthru
          _
        %p381 = scmp.lt.s32.totalorder %s23, 1
        %s382 = scalar_select %p381, %s23, 1
        %s383 = smul.addr %s382, 4
        %s384 = scalar_lea.vmem %s2, %s383
        // Predicated region
        $region45: #{tpu_custom_call.1} parent=27 // pred_check
          %p385 = pneg %p105
        $region46: #{tpu_custom_call.1} parent=27 // pred_check_branch
          %387 = sbr.rel (%p385) target = $region48
        $region47: #{tpu_custom_call.1} parent=27 // pred_region
          _
        $region48: #{tpu_custom_call.1} parent=27 // pred_fallthru
          _
      $region28: #{tpu_custom_call.1} parent=5 // pred_fallthru
        _
      %p388 = scmp.le.s32.totalorder 2, %s14
      // Predicated region
      $region49: #{tpu_custom_call.1} parent=5 // pred_check
        %p389 = pneg %p388
      $region50: #{tpu_custom_call.1} parent=5 // pred_check_branch
        %391 = sbr.rel (%p389) target = $region52
      $region51: #{tpu_custom_call.1} parent=5 // pred_region
        %s392 = ssub.s32 %s14, 2
        // Predicated region
        $region53: #{tpu_custom_call.1} parent=51 // pred_check
          %p393 = pneg %p111
        $region54: #{tpu_custom_call.1} parent=51 // pred_check_branch
          %395 = sbr.rel (%p393) target = $region56
        $region55: #{tpu_custom_call.1} parent=51 // pred_region
          %p396 = scmp.lt.s32.totalorder %s25, 1
          %s397 = scalar_select %p396, %s25, 1
          %s398 = smul.addr %s397, 4
          %s399 = scalar_lea.vmem %s2, %s398
        $region56: #{tpu_custom_call.1} parent=51 // pred_fallthru
          _
      $region52: #{tpu_custom_call.1} parent=5 // pred_fallthru
        _
    $region6: #{tpu_custom_call.1} parent=1 // loop_footer
      %s18 = sadd.s32 1, %s14
    $region7: #{tpu_custom_call.1} parent=1 // loop_footer_branch
      %13 = sbr.rel target = $region3
    $region8: #{tpu_custom_call.1} parent=1 // loop_exit
      _
    %400 = vsyncpa [#allocation6], 1
    %s401 = scalar_lea.sflag [#allocation6], 1
    %402 = vsyncpa %s401, 1
    %403 = vsyncpa [#allocation8], 1
    %s404 = scalar_lea.sflag [#allocation8], 1
    %405 = vsyncpa %s404, 1

</llo_original>
